<compile_context>
chip_gen: v5e
topology: v5e:2x2
jax: 0.10.0
libtpu: 0.0.40
codegen_flags: <defaults>
</compile_context>

<pallas_src>
import jax
import jax.numpy as jnp
from jax.experimental import pallas as pl
from jax.experimental.pallas import tpu as pltpu


LANE_GROUP = 8      # batch rows packed per lane group (8*hidden=256, 8*out=128)
MAX_TILE_B = 8192   # default rows per grid step (sweep parameter)


def _round_up(x, m):
    return (x + m - 1) // m * m


def gen_mlp_kernel(ids_ref, rep_ref, mod_ref,
                   w1_ref, b1_ref, w2_ref, b2_ref, w3_ref, b3_ref, o_ref):
    """Fused embedding gather (one-hot-as-matmul) + 3x(Linear, Tanh), lane-packed.

    ids_ref : (R, G*attr_num) int32   -- G batch rows packed per sublane row
    rep_ref : (G*attr_num, G*k_dim)   -- 0/1 matrix replicating each id over its
                                         n_rows-wide one-hot slot
    mod_ref : (1, G*k_dim) f32        -- lane % n_rows
    w1_ref  : (G*k_dim, G*hidden)     -- block-diag of (embedding folded into L1)
    w2_ref  : (G*hidden, G*hidden)    -- block-diag of L2
    w3_ref  : (G*hidden, G*user)      -- block-diag of L3
    o_ref   : (R, G*user) lane-dense output slab
    """
    ids_f = ids_ref[...].astype(jnp.float32)

    # Replicate each id across its one-hot slot with a tiny MXU matmul; ids are
    # small ints so the f32 equality below is exact.  Out-of-range ids produce
    # an all-zero slot (contribution dropped) instead of raising like
    # nn.Embedding -- validate upstream if that matters.
    ids_rep = jnp.dot(ids_f, rep_ref[...], preferred_element_type=jnp.float32)
    onehot = (ids_rep == mod_ref[...]).astype(jnp.float32)

    # NOTE: for large attr_num / vocab (k_dim of a few hundred+) replace this
    # one-hot @ W1eff with a real gather from a VMEM-resident embedding table.
    h = jnp.tanh(
        jnp.dot(onehot, w1_ref[...], preferred_element_type=jnp.float32)
        + b1_ref[...]
    )
    h = jnp.tanh(
        jnp.dot(h, w2_ref[...], preferred_element_type=jnp.float32) + b2_ref[...]
    )
    o_ref[...] = jnp.tanh(
        jnp.dot(h, w3_ref[...], preferred_element_type=jnp.float32) + b3_ref[...]
    ).astype(o_ref.dtype)


def gen_forward(attribute_id, params, max_tile_b=MAX_TILE_B,
                out_dtype=jnp.float32):
    """Forward pass of Gen. attribute_id: (B, attr_num) int32."""
    emb = params["embed"]                        # (2*attr_num, P)
    w1, b1 = params["w1"], params["b1"]          # (attr_num*P, H), (1, H)
    w2, b2 = params["w2"], params["b2"]          # (H, H), (1, H)
    w3, b3 = params["w3"], params["b3"]          # (H, U), (1, U)

    B, attr_num = attribute_id.shape
    n_rows, p_dim = emb.shape                    # n_rows = 2 * attr_num
    hidden = w1.shape[1]
    user_emb_dim = w3.shape[1]
    k_dim = attr_num * n_rows
    G = LANE_GROUP

    # ---- wrapper-side weight prep (tiny arrays) ----
    # Fold embedding into Linear-1: onehot(ids) @ w1_eff == gathered_x @ w1.
    w1_eff = jnp.einsum(
        "rp,jph->jrh", emb, w1.reshape(attr_num, p_dim, hidden)
    ).reshape(k_dim, hidden)

    eye_g = jnp.eye(G, dtype=jnp.float32)
    w1_bd = jnp.kron(eye_g, w1_eff)                      # (G*k_dim, G*hidden)
    w2_bd = jnp.kron(eye_g, w2)                          # (G*hidden, G*hidden)
    w3_bd = jnp.kron(eye_g, w3)                          # (G*hidden, G*user)
    b1_bd = jnp.tile(b1.reshape(1, hidden), (1, G))
    b2_bd = jnp.tile(b2.reshape(1, hidden), (1, G))
    b3_bd = jnp.tile(b3.reshape(1, user_emb_dim), (1, G))
    rep = jnp.kron(jnp.eye(G * attr_num, dtype=jnp.float32),
                   jnp.ones((1, n_rows), jnp.float32))   # (G*attr_num, G*k_dim)
    mod = jnp.tile(jnp.arange(n_rows, dtype=jnp.float32),
                   (G * attr_num,)).reshape(1, G * k_dim)

    # ---- batch tiling ----
    tile_unit = 8 * G                       # 8 f32 sublanes of lane-packed rows
    max_tile = max(tile_unit, (max_tile_b // tile_unit) * tile_unit)
    b_ceil = _round_up(B, tile_unit)
    if b_ceil >= 2 * tile_unit:
        # Prefer >= 2 grid steps so both v7x TensorCores get work.
        tile_b = min(max_tile, _round_up(pl.cdiv(b_ceil, 2), tile_unit))
    else:
        tile_b = tile_unit
    b_pad = _round_up(B, tile_b)

    ids = attribute_id.astype(jnp.int32)
    if b_pad != B:
        ids = jnp.pad(ids, ((0, b_pad - B), (0, 0)))     # pad with valid id 0
    ids_packed = ids.reshape(b_pad // G, G * attr_num)   # G rows per packed row

    grid = (b_pad // tile_b,)
    rt = tile_b // G                                     # packed rows per tile

    def batch_spec(shape):
        return pl.BlockSpec(shape, lambda i: (i, 0))

    def const_spec(shape):
        # Constant index_map: block stays VMEM-resident across the whole grid.
        return pl.BlockSpec(shape, lambda i: (0, 0))

    out_packed = pl.pallas_call(
        gen_mlp_kernel,
        out_shape=jax.ShapeDtypeStruct((b_pad // G, G * user_emb_dim), out_dtype),
        grid=grid,
        in_specs=[
            batch_spec((rt, G * attr_num)),      # ids: streamed over batch
            const_spec(rep.shape),               # replication matrix
            const_spec(mod.shape),               # lane % n_rows
            const_spec(w1_bd.shape),             # block-diag W1eff
            const_spec(b1_bd.shape),
            const_spec(w2_bd.shape),
            const_spec(b2_bd.shape),
            const_spec(w3_bd.shape),
            const_spec(b3_bd.shape),
        ],
        out_specs=batch_spec((rt, G * user_emb_dim)),    # lane-dense 128-wide
        compiler_params=pltpu.CompilerParams(
            dimension_semantics=("parallel",),   # shard batch axis across TCs
            vmem_limit_bytes=32 * 1024 * 1024,   # safe on v5e/v6e/v7x
        ),
    )(ids_packed, rep, mod, w1_bd, b1_bd, w2_bd, b2_bd, w3_bd, b3_bd)

    return out_packed.reshape(b_pad, user_emb_dim)[:B]


def gen_forward_ref(attribute_id, params):
    """Pure-JAX reference (matches the PyTorch module)."""
    emb = params["embed"]
    attr_num = attribute_id.shape[-1]
    p_dim = emb.shape[-1]
    x = jnp.take(emb, attribute_id, axis=0).reshape(-1, attr_num * p_dim)
    h = jnp.tanh(x @ params["w1"] + params["b1"])
    h = jnp.tanh(h @ params["w2"] + params["b2"])
    return jnp.tanh(h @ params["w3"] + params["b3"])


def xavier_uniform(key, fan_in, fan_out):
    limit = jnp.sqrt(6.0 / (fan_in + fan_out))
    # Stored as (in, out) so the kernel computes x @ W (== PyTorch x @ W_pt.T).
    return jax.random.uniform(key, (fan_in, fan_out), jnp.float32, -limit, limit)


def init_params(key, attr_num, attr_present_dim, hidden_dim, user_emb_dim):
    k_emb, k1, k2, k3 = jax.random.split(key, 4)
    in_dim = attr_num * attr_present_dim
    return {
        # PyTorch nn.Embedding default init: N(0, 1)
        "embed": jax.random.normal(
            k_emb, (2 * attr_num, attr_present_dim), jnp.float32
        ),
        "w1": xavier_uniform(k1, in_dim, hidden_dim),
        "b1": jnp.zeros((1, hidden_dim), jnp.float32),
        "w2": xavier_uniform(k2, hidden_dim, hidden_dim),
        "b2": jnp.zeros((1, hidden_dim), jnp.float32),
        "w3": xavier_uniform(k3, hidden_dim, user_emb_dim),
        "b3": jnp.zeros((1, user_emb_dim), jnp.float32),
    }


if __name__ == "__main__":
    # Small shapes consistent with the module.
    attr_num = 4
    attr_present_dim = 8
    hidden_dim = 32
    user_emb_dim = 16
    batch = 10  # not a multiple of the 64-row tile unit: exercises padding

    key = jax.random.PRNGKey(0)
    k_params, k_ids, k_ids2 = jax.random.split(key, 3)

    params = init_params(
        k_params, attr_num, attr_present_dim, hidden_dim, user_emb_dim
    )

    attribute_id = jax.random.randint(
        k_ids, (batch, attr_num), minval=0, maxval=2 * attr_num, dtype=jnp.int32
    )

    fake_user = gen_forward(attribute_id, params)
    jax.block_until_ready(fake_user)

    assert fake_user.shape == (batch, user_emb_dim)
    assert bool(jnp.all(jnp.isfinite(fake_user)))
    ref = gen_forward_ref(attribute_id, params)
    assert float(jnp.max(jnp.abs(fake_user - ref))) < 5e-2

    # Exercise multi-step grid + ragged batch (tile_b=64 -> grid=(4,)).
    ids2 = jax.random.randint(
        k_ids2, (200, attr_num), minval=0, maxval=2 * attr_num, dtype=jnp.int32
    )
    out2 = gen_forward(ids2, params, max_tile_b=64)
    jax.block_until_ready(out2)
    ref2 = gen_forward_ref(ids2, params)
    assert out2.shape == (200, user_emb_dim)
    assert float(jnp.max(jnp.abs(out2 - ref2))) < 5e-2

    print("KERNEL_OK")
</pallas_src>

<mosaic_0001>
module attributes {stable_mosaic.version = 11 : i64} {
  func.func @gen_mlp_kernel(%arg0: i32, %arg1: memref<8x32xi32, #tpu.memory_space<vmem>>, %arg2: memref<32x256xf32, #tpu.memory_space<vmem>>, %arg3: memref<1x256xf32, #tpu.memory_space<vmem>>, %arg4: memref<256x256xf32, #tpu.memory_space<vmem>>, %arg5: memref<1x256xf32, #tpu.memory_space<vmem>>, %arg6: memref<256x256xf32, #tpu.memory_space<vmem>>, %arg7: memref<1x256xf32, #tpu.memory_space<vmem>>, %arg8: memref<256x128xf32, #tpu.memory_space<vmem>>, %arg9: memref<1x128xf32, #tpu.memory_space<vmem>>, %arg10: memref<8x128xf32, #tpu.memory_space<vmem>>) attributes {dimension_semantics = [#tpu.dimension_semantics<parallel>], iteration_bounds = array<i64: 1>, scalar_prefetch = 0 : i64, scratch_operands = 0 : i64, tpu.core_type = #tpu.core_type<tc>, window_params = [{transform_indices = @transform_0, window_bounds = array<i64: 8, 32>}, {pipeline_mode = #tpu.pipeline_mode<synchronous>, transform_indices = @transform_1, window_bounds = array<i64: 32, 256>}, {pipeline_mode = #tpu.pipeline_mode<synchronous>, transform_indices = @transform_2, window_bounds = array<i64: 1, 256>}, {pipeline_mode = #tpu.pipeline_mode<synchronous>, transform_indices = @transform_3, window_bounds = array<i64: 256, 256>}, {pipeline_mode = #tpu.pipeline_mode<synchronous>, transform_indices = @transform_4, window_bounds = array<i64: 1, 256>}, {pipeline_mode = #tpu.pipeline_mode<synchronous>, transform_indices = @transform_5, window_bounds = array<i64: 256, 256>}, {pipeline_mode = #tpu.pipeline_mode<synchronous>, transform_indices = @transform_6, window_bounds = array<i64: 1, 256>}, {pipeline_mode = #tpu.pipeline_mode<synchronous>, transform_indices = @transform_7, window_bounds = array<i64: 256, 128>}, {pipeline_mode = #tpu.pipeline_mode<synchronous>, transform_indices = @transform_8, window_bounds = array<i64: 1, 128>}, {transform_indices = @transform_9, window_bounds = array<i64: 8, 128>}]} {
    %c0 = arith.constant 0 : index
    %c0_0 = arith.constant 0 : index
    %0 = vector.load %arg1[%c0, %c0_0] : memref<8x32xi32, #tpu.memory_space<vmem>>, vector<8x32xi32>
    %1 = arith.sitofp %0 : vector<8x32xi32> to vector<8x32xf32>
    %c0_1 = arith.constant 0 : index
    %c0_2 = arith.constant 0 : index
    %2 = vector.load %arg2[%c0_1, %c0_2] : memref<32x256xf32, #tpu.memory_space<vmem>>, vector<32x256xf32>
    %cst = arith.constant dense<0.000000e+00> : vector<8x256xf32>
    %3 = tpu.matmul %1, %2, %cst {dimension_numbers = #tpu.dot_dimension_numbers<[1], [0], [0], [1], [0, 0, 1, 1], [], []>} : vector<8x32xf32>, vector<32x256xf32>, vector<8x256xf32> -> vector<8x256xf32>
    %c0_3 = arith.constant 0 : index
    %c0_4 = arith.constant 0 : index
    %4 = vector.load %arg3[%c0_3, %c0_4] : memref<1x256xf32, #tpu.memory_space<vmem>>, vector<1x256xf32>
    %5 = vector.broadcast %4 : vector<1x256xf32> to vector<8x256xf32>
    %6 = arith.cmpf oeq, %3, %5 : vector<8x256xf32>
    %7 = arith.extui %6 : vector<8x256xi1> to vector<8x256xi32>
    %8 = arith.sitofp %7 : vector<8x256xi32> to vector<8x256xf32>
    %c0_5 = arith.constant 0 : index
    %c0_6 = arith.constant 0 : index
    %9 = vector.load %arg4[%c0_5, %c0_6] : memref<256x256xf32, #tpu.memory_space<vmem>>, vector<256x256xf32>
    %cst_7 = arith.constant dense<0.000000e+00> : vector<8x256xf32>
    %10 = tpu.matmul %8, %9, %cst_7 {dimension_numbers = #tpu.dot_dimension_numbers<[1], [0], [0], [1], [0, 0, 1, 1], [], []>} : vector<8x256xf32>, vector<256x256xf32>, vector<8x256xf32> -> vector<8x256xf32>
    %c0_8 = arith.constant 0 : index
    %c0_9 = arith.constant 0 : index
    %11 = vector.load %arg5[%c0_8, %c0_9] : memref<1x256xf32, #tpu.memory_space<vmem>>, vector<1x256xf32>
    %12 = vector.broadcast %11 : vector<1x256xf32> to vector<8x256xf32>
    %13 = arith.addf %10, %12 : vector<8x256xf32>
    %14 = math.tanh %13 : vector<8x256xf32>
    %c0_10 = arith.constant 0 : index
    %c0_11 = arith.constant 0 : index
    %15 = vector.load %arg6[%c0_10, %c0_11] : memref<256x256xf32, #tpu.memory_space<vmem>>, vector<256x256xf32>
    %cst_12 = arith.constant dense<0.000000e+00> : vector<8x256xf32>
    %16 = tpu.matmul %14, %15, %cst_12 {dimension_numbers = #tpu.dot_dimension_numbers<[1], [0], [0], [1], [0, 0, 1, 1], [], []>} : vector<8x256xf32>, vector<256x256xf32>, vector<8x256xf32> -> vector<8x256xf32>
    %c0_13 = arith.constant 0 : index
    %c0_14 = arith.constant 0 : index
    %17 = vector.load %arg7[%c0_13, %c0_14] : memref<1x256xf32, #tpu.memory_space<vmem>>, vector<1x256xf32>
    %18 = vector.broadcast %17 : vector<1x256xf32> to vector<8x256xf32>
    %19 = arith.addf %16, %18 : vector<8x256xf32>
    %20 = math.tanh %19 : vector<8x256xf32>
    %c0_15 = arith.constant 0 : index
    %c0_16 = arith.constant 0 : index
    %21 = vector.load %arg8[%c0_15, %c0_16] : memref<256x128xf32, #tpu.memory_space<vmem>>, vector<256x128xf32>
    %cst_17 = arith.constant dense<0.000000e+00> : vector<8x128xf32>
    %22 = tpu.matmul %20, %21, %cst_17 {dimension_numbers = #tpu.dot_dimension_numbers<[1], [0], [0], [1], [0, 0, 1, 1], [], []>} : vector<8x256xf32>, vector<256x128xf32>, vector<8x128xf32> -> vector<8x128xf32>
    %c0_18 = arith.constant 0 : index
    %c0_19 = arith.constant 0 : index
    %23 = vector.load %arg9[%c0_18, %c0_19] : memref<1x128xf32, #tpu.memory_space<vmem>>, vector<1x128xf32>
    %24 = vector.broadcast %23 : vector<1x128xf32> to vector<8x128xf32>
    %25 = arith.addf %22, %24 : vector<8x128xf32>
    %26 = math.tanh %25 : vector<8x128xf32>
    %c0_20 = arith.constant 0 : index
    %c0_21 = arith.constant 0 : index
    %27 = vector.load %arg10[%c0_20, %c0_21] : memref<8x128xf32, #tpu.memory_space<vmem>>, vector<8x128xf32>
    tpu.vector_store %arg10[%c0_20, %c0_21], %26 {strides = array<i32>} : memref<8x128xf32, #tpu.memory_space<vmem>>, vector<8x128xf32>,
    return
  }
  func.func @transform_0(%arg0: i32) -> (i32, i32) {
    %c0_i32 = arith.constant 0 : i32
    %c0_i32_0 = arith.constant 0 : i32
    return %arg0, %c0_i32 : i32, i32
  }
  func.func @transform_1(%arg0: i32) -> (i32, i32) {
    %c0_i32 = arith.constant 0 : i32
    %c0_i32_0 = arith.constant 0 : i32
    %c0_i32_1 = arith.constant 0 : i32
    return %c0_i32, %c0_i32_0 : i32, i32
  }
  func.func @transform_2(%arg0: i32) -> (i32, i32) {
    %c0_i32 = arith.constant 0 : i32
    %c0_i32_0 = arith.constant 0 : i32
    %c0_i32_1 = arith.constant 0 : i32
    return %c0_i32, %c0_i32_0 : i32, i32
  }
  func.func @transform_3(%arg0: i32) -> (i32, i32) {
    %c0_i32 = arith.constant 0 : i32
    %c0_i32_0 = arith.constant 0 : i32
    %c0_i32_1 = arith.constant 0 : i32
    return %c0_i32, %c0_i32_0 : i32, i32
  }
  func.func @transform_4(%arg0: i32) -> (i32, i32) {
    %c0_i32 = arith.constant 0 : i32
    %c0_i32_0 = arith.constant 0 : i32
    %c0_i32_1 = arith.constant 0 : i32
    return %c0_i32, %c0_i32_0 : i32, i32
  }
  func.func @transform_5(%arg0: i32) -> (i32, i32) {
    %c0_i32 = arith.constant 0 : i32
    %c0_i32_0 = arith.constant 0 : i32
    %c0_i32_1 = arith.constant 0 : i32
    return %c0_i32, %c0_i32_0 : i32, i32
  }
  func.func @transform_6(%arg0: i32) -> (i32, i32) {
    %c0_i32 = arith.constant 0 : i32
    %c0_i32_0 = arith.constant 0 : i32
    %c0_i32_1 = arith.constant 0 : i32
    return %c0_i32, %c0_i32_0 : i32, i32
  }
  func.func @transform_7(%arg0: i32) -> (i32, i32) {
    %c0_i32 = arith.constant 0 : i32
    %c0_i32_0 = arith.constant 0 : i32
    %c0_i32_1 = arith.constant 0 : i32
    return %c0_i32, %c0_i32_0 : i32, i32
  }
  func.func @transform_8(%arg0: i32) -> (i32, i32) {
    %c0_i32 = arith.constant 0 : i32
    %c0_i32_0 = arith.constant 0 : i32
    %c0_i32_1 = arith.constant 0 : i32
    return %c0_i32, %c0_i32_0 : i32, i32
  }
  func.func @transform_9(%arg0: i32) -> (i32, i32) {
    %c0_i32 = arith.constant 0 : i32
    %c0_i32_0 = arith.constant 0 : i32
    return %arg0, %c0_i32 : i32, i32
  }
}

</mosaic_0001>

<llo_original>
// kernel: tpu_custom_call.1
$region0: #{tpu_custom_call.1}
  #allocation0 [shape = 'u32[]', space=smem, size = 0x4, offset = 0x4, fixed_abs, tag = 'smem constant byte address 0x4 - core index']
  #allocation1 [shape = 'u32[72,128]{1,0:T(1,128)}', space=vmem, size = 0x9000, scoped, tag = 'internal scratch']
  %s0 = inlined_call_operand.hbm [shape: s32[8,32], index: 0, kind: input, shape index: {}]
  %s1 = inlined_call_operand.hbm [shape: f32[32,256], index: 1, kind: input, shape index: {}]
  %s2 = inlined_call_operand.hbm [shape: f32[1,256], index: 2, kind: input, shape index: {}]
  %s3 = inlined_call_operand.hbm [shape: f32[256,256], index: 3, kind: input, shape index: {}]
  %s4 = inlined_call_operand.vmem [shape: f32[1,256], index: 4, kind: input, shape index: {}]
  %s5 = inlined_call_operand.hbm [shape: f32[256,256], index: 5, kind: input, shape index: {}]
  %s6 = inlined_call_operand.vmem [shape: f32[1,256], index: 6, kind: input, shape index: {}]
  %s7 = inlined_call_operand.hbm [shape: f32[256,128], index: 7, kind: input, shape index: {}]
  %s8 = inlined_call_operand.vmem [shape: f32[1,128], index: 8, kind: input, shape index: {}]
  %s9 = inlined_call_operand.hbm [shape: f32[8,128], index: 9, kind: output, shape index: {}]
  %s10 = sld [smem:[#allocation0]]
  $region70: #{tpu_custom_call.1} parent=0
    _
  %s12 = ssub.s32 1, %s10
  %s13 = scalar_select 0, %s12, %s10
  $region1: #{tpu_custom_call.1} parent=0
    #allocation2 [shape = 'u8[4096]{0}', space=vmem, size = 0x1000, scoped, tag = 'input window, operand 0, single buffered']
    #allocation3 [shape = 's32[1]{0}', space=sflag, size = 0x4, scoped, tag = 'scoped memory for tpu_custom_call.1']
    #allocation4 [shape = 's32[1]{0}', space=sflag, size = 0x4, scoped, tag = 'scoped memory for tpu_custom_call.1']
    #allocation5 [shape = 'u8[32768]{0}', space=vmem, size = 0x8000, scoped, tag = 'input window, operand 1, single buffered']
    #allocation6 [shape = 's32[1]{0}', space=sflag, size = 0x4, scoped, tag = 'scoped memory for tpu_custom_call.1']
    #allocation7 [shape = 'u8[1024]{0}', space=vmem, size = 0x400, scoped, tag = 'input window, operand 2, single buffered']
    #allocation8 [shape = 'u8[262144]{0}', space=vmem, size = 0x40000, scoped, tag = 'input window, operand 3, single buffered']
    #allocation9 [shape = 's32[1]{0}', space=sflag, size = 0x4, scoped, tag = 'scoped memory for tpu_custom_call.1']
    #allocation10 [shape = 'u8[262144]{0}', space=vmem, size = 0x40000, scoped, tag = 'input window, operand 5, single buffered']
    #allocation11 [shape = 'u8[131072]{0}', space=vmem, size = 0x20000, scoped, tag = 'input window, operand 7, single buffered']
    #allocation12 [shape = 's32[1]{0}', space=sflag, size = 0x4, scoped, tag = 'scoped memory for tpu_custom_call.1']
    #allocation13 [shape = 'u8[4096]{0}', space=vmem, size = 0x1000, scoped, tag = 'output window, operand 0, single buffered']
    %14 = vsyncpa [#allocation3], 0
    %15 = vsyncpa [#allocation6], 0
    %16 = vsyncpa [#allocation9], 0
    %17 = vsyncpa [#allocation12], 0
    %18 = vsyncpa [#allocation4], 0
    // Predicated region
    $region2: #{tpu_custom_call.1} parent=1 // pred_check
      _
    $region3: #{tpu_custom_call.1} parent=1 // pred_check_branch
      %20 = sbr.rel (0) target = $region5
    $region4: #{tpu_custom_call.1} parent=1 // pred_region
      %22 = vsyncadd [#allocation3], 0
      %s24 = sshll.u32 %s0, 4
      %s25 = int_to_ptr.hbm [resolvable:$true] %s24
      %s26 = sshll.u32 [#allocation2], 4
      %s27 = int_to_ptr.vmem [resolvable:$true] %s26
      %29 = dma.hbm_to_vmem [thread:$0]  %s25, 128, %s27, [#allocation3]
    $region5: #{tpu_custom_call.1} parent=1 // pred_fallthru
      _
    // Predicated region
    $region6: #{tpu_custom_call.1} parent=1 // pred_check
      _
    $region7: #{tpu_custom_call.1} parent=1 // pred_check_branch
      %31 = sbr.rel (0) target = $region9
    $region8: #{tpu_custom_call.1} parent=1 // pred_region
      %33 = vsyncadd [#allocation6], 0
      %s34 = sshll.u32 %s1, 4
      %s35 = int_to_ptr.hbm [resolvable:$true] %s34
      %s36 = sshll.u32 [#allocation5], 4
      %s37 = int_to_ptr.vmem [resolvable:$true] %s36
      %42 = dma.hbm_to_vmem [thread:$0]  %s35, 1024, %s37, [#allocation6], 256, 256, 16
    $region9: #{tpu_custom_call.1} parent=1 // pred_fallthru
      _
    // Predicated region
    $region10: #{tpu_custom_call.1} parent=1 // pred_check
      _
    $region11: #{tpu_custom_call.1} parent=1 // pred_check_branch
      %44 = sbr.rel (0) target = $region13
    $region12: #{tpu_custom_call.1} parent=1 // pred_region
      %46 = vsyncadd [#allocation6], 0
      %s48 = sshll.u32 %s2, 4
      %s49 = int_to_ptr.hbm [resolvable:$true] %s48
      %s50 = sshll.u32 [#allocation7], 4
      %s51 = int_to_ptr.vmem [resolvable:$true] %s50
      %53 = dma.hbm_to_vmem [thread:$0]  %s49, 32, %s51, [#allocation6]
    $region13: #{tpu_custom_call.1} parent=1 // pred_fallthru
      _
    // Predicated region
    $region14: #{tpu_custom_call.1} parent=1 // pred_check
      _
    $region15: #{tpu_custom_call.1} parent=1 // pred_check_branch
      %55 = sbr.rel (0) target = $region17
    $region16: #{tpu_custom_call.1} parent=1 // pred_region
      %57 = vsyncadd [#allocation9], 0
      %s58 = sshll.u32 %s3, 4
      %s59 = int_to_ptr.hbm [resolvable:$true] %s58
      %s60 = sshll.u32 [#allocation8], 4
      %s61 = int_to_ptr.vmem [resolvable:$true] %s60
      %66 = dma.hbm_to_vmem [thread:$0]  %s59, 8192, %s61, [#allocation9], 256, 256, 16
    $region17: #{tpu_custom_call.1} parent=1 // pred_fallthru
      _
    // Predicated region
    $region18: #{tpu_custom_call.1} parent=1 // pred_check
      _
    $region19: #{tpu_custom_call.1} parent=1 // pred_check_branch
      %68 = sbr.rel (0) target = $region21
    $region20: #{tpu_custom_call.1} parent=1 // pred_region
      _
    $region21: #{tpu_custom_call.1} parent=1 // pred_fallthru
      _
    // Predicated region
    $region22: #{tpu_custom_call.1} parent=1 // pred_check
      _
    $region23: #{tpu_custom_call.1} parent=1 // pred_check_branch
      %70 = sbr.rel (0) target = $region25
    $region24: #{tpu_custom_call.1} parent=1 // pred_region
      %72 = vsyncadd [#allocation9], 0
      %s73 = sshll.u32 %s5, 4
      %s74 = int_to_ptr.hbm [resolvable:$true] %s73
      %s75 = sshll.u32 [#allocation10], 4
      %s76 = int_to_ptr.vmem [resolvable:$true] %s75
      %81 = dma.hbm_to_vmem [thread:$0]  %s74, 8192, %s76, [#allocation9], 256, 256, 16
    $region25: #{tpu_custom_call.1} parent=1 // pred_fallthru
      _
    // Predicated region
    $region26: #{tpu_custom_call.1} parent=1 // pred_check
      _
    $region27: #{tpu_custom_call.1} parent=1 // pred_check_branch
      %83 = sbr.rel (0) target = $region29
    $region28: #{tpu_custom_call.1} parent=1 // pred_region
      _
    $region29: #{tpu_custom_call.1} parent=1 // pred_fallthru
      _
    // Predicated region
    $region30: #{tpu_custom_call.1} parent=1 // pred_check
      _
    $region31: #{tpu_custom_call.1} parent=1 // pred_check_branch
      %85 = sbr.rel (0) target = $region33
    $region32: #{tpu_custom_call.1} parent=1 // pred_region
      %87 = vsyncadd [#allocation12], 0
      %s88 = sshll.u32 %s7, 4
      %s89 = int_to_ptr.hbm [resolvable:$true] %s88
      %s90 = sshll.u32 [#allocation11], 4
      %s91 = int_to_ptr.vmem [resolvable:$true] %s90
      %96 = dma.hbm_to_vmem [thread:$0]  %s89, 4096, %s91, [#allocation12], 128, 128, 8
    $region33: #{tpu_custom_call.1} parent=1 // pred_fallthru
      _
    // Predicated region
    $region34: #{tpu_custom_call.1} parent=1 // pred_check
      _
    $region35: #{tpu_custom_call.1} parent=1 // pred_check_branch
      %98 = sbr.rel (0) target = $region37
    $region36: #{tpu_custom_call.1} parent=1 // pred_region
      _
    $region37: #{tpu_custom_call.1} parent=1 // pred_fallthru
      _
    // Predicated region
    $region38: #{tpu_custom_call.1} parent=1 // pred_check
      _
    $region39: #{tpu_custom_call.1} parent=1 // pred_check_branch
      %100 = sbr.rel (0) target = $region41
    $region40: #{tpu_custom_call.1} parent=1 // pred_region
      %102 = dma.done [#allocation3], 128
    $region41: #{tpu_custom_call.1} parent=1 // pred_fallthru
      _
    // Predicated region
    $region42: #{tpu_custom_call.1} parent=1 // pred_check
      _
    $region43: #{tpu_custom_call.1} parent=1 // pred_check_branch
      %104 = sbr.rel (0) target = $region45
    $region44: #{tpu_custom_call.1} parent=1 // pred_region
      %106 = dma.done [#allocation6], 1024
    $region45: #{tpu_custom_call.1} parent=1 // pred_fallthru
      _
    // Predicated region
    $region46: #{tpu_custom_call.1} parent=1 // pred_check
      _
    $region47: #{tpu_custom_call.1} parent=1 // pred_check_branch
      %108 = sbr.rel (0) target = $region49
    $region48: #{tpu_custom_call.1} parent=1 // pred_region
      %110 = dma.done [#allocation6], 32
    $region49: #{tpu_custom_call.1} parent=1 // pred_fallthru
      _
    // Predicated region
    $region50: #{tpu_custom_call.1} parent=1 // pred_check
      _
    $region51: #{tpu_custom_call.1} parent=1 // pred_check_branch
      %112 = sbr.rel (0) target = $region53
    $region52: #{tpu_custom_call.1} parent=1 // pred_region
      %114 = dma.done [#allocation9], 8192
    $region53: #{tpu_custom_call.1} parent=1 // pred_fallthru
      _
    // Predicated region
    $region54: #{tpu_custom_call.1} parent=1 // pred_check
      _
    $region55: #{tpu_custom_call.1} parent=1 // pred_check_branch
      %116 = sbr.rel (0) target = $region57
    $region56: #{tpu_custom_call.1} parent=1 // pred_region
      %118 = dma.done [#allocation9], 8192
    $region57: #{tpu_custom_call.1} parent=1 // pred_fallthru
      _
    // Predicated region
    $region58: #{tpu_custom_call.1} parent=1 // pred_check
      _
    $region59: #{tpu_custom_call.1} parent=1 // pred_check_branch
      %120 = sbr.rel (0) target = $region61
    $region60: #{tpu_custom_call.1} parent=1 // pred_region
      %122 = dma.done [#allocation12], 4096
    $region61: #{tpu_custom_call.1} parent=1 // pred_fallthru
      _
    %v123 = vld [vmem:[#allocation2] sm:$0xff]
    %v124 = vcvt.s32.f32 %v123
    %v125 = vld [vmem:[#allocation5] sm:$0xff]
    %v126 = vld [vmem:[#allocation5 + $0x8] sm:$0xff]
    %v127 = vld [vmem:[#allocation5 + $0x10] sm:$0xff]
    %v128 = vld [vmem:[#allocation5 + $0x18] sm:$0xff]
    %v129 = vld [vmem:[#allocation5 + $0x20] sm:$0xff]
    %v130 = vld [vmem:[#allocation5 + $0x28] sm:$0xff]
    %v131 = vld [vmem:[#allocation5 + $0x30] sm:$0xff]
    %v132 = vld [vmem:[#allocation5 + $0x38] sm:$0xff]
    %vm133 = vcmask 261120
    %v135 = vsel %vm133, %v124, 0
    %137 = vmatpush.msra.mxu0 0.0
    %138 = vmatpush.msra.mxu0 0.0
    %139 = vmatpush.msra.mxu0 0.0
    %140 = vmatpush.msra.mxu0 0.0
    %141 = vmatpush.msra.mxu0 0.0
    %142 = vmatpush.msra.mxu0 0.0
    %143 = vmatpush.msra.mxu0 0.0
    %144 = vmatpush.msra.mxu0 0.0
    %145 = vmatpush.msra.mxu0 0.0
    %146 = vmatpush.msra.mxu0 0.0
    %147 = vmatpush.msra.mxu0 0.0
    %148 = vmatpush.msra.mxu0 0.0
    %149 = vmatpush.msra.mxu0 %v131
    %150 = vmatpush.msra.mxu0 %v129
    %151 = vmatpush.msra.mxu0 %v127
    %152 = vmatpush.msra.mxu0 %v125
    %153 = vmatmul.f32.gmra.mxu0 %v135
    %v154 = vpop.f32.mrf.mxu0
    %v155 = vadd.f32 0.0, %v154
    %156 = vdwg.mxu0
    %157 = vmatpush.msra.mxu0 0.0
    %158 = vmatpush.msra.mxu0 0.0
    %159 = vmatpush.msra.mxu0 0.0
    %160 = vmatpush.msra.mxu0 0.0
    %161 = vmatpush.msra.mxu0 0.0
    %162 = vmatpush.msra.mxu0 0.0
    %163 = vmatpush.msra.mxu0 0.0
    %164 = vmatpush.msra.mxu0 0.0
    %165 = vmatpush.msra.mxu0 0.0
    %166 = vmatpush.msra.mxu0 0.0
    %167 = vmatpush.msra.mxu0 0.0
    %168 = vmatpush.msra.mxu0 0.0
    %169 = vmatpush.msra.mxu0 %v132
    %170 = vmatpush.msra.mxu0 %v130
    %171 = vmatpush.msra.mxu0 %v128
    %172 = vmatpush.msra.mxu0 %v126
    %173 = vmatmul.f32.gmra.mxu0 %v135
    %v174 = vpop.f32.mrf.mxu0
    %v175 = vadd.f32 0.0, %v174
    %176 = vdwg.mxu0
    %v177 = vld [vmem:[#allocation7] sm:$0x3]
    %v179 = vperm.slane %v177, 0
    %v180 = vperm.slane %v177, 1
    %vm183 = vcmp.eq.f32.partialorder %v155, %v179
    %vm184 = vcmp.eq.f32.partialorder %v175, %v180
    %v185 = vsel %vm183, 1, 0
    %v186 = vsel %vm184, 1, 0
    %v187 = vcvt.s32.f32 %v185
    %v188 = vcvt.s32.f32 %v186
    %v189 = vld [vmem:[#allocation8] sm:$0xff]
    %v190 = vld [vmem:[#allocation8 + $0x8] sm:$0xff]
    %v191 = vld [vmem:[#allocation8 + $0x10] sm:$0xff]
    %v192 = vld [vmem:[#allocation8 + $0x18] sm:$0xff]
    %v193 = vld [vmem:[#allocation8 + $0x20] sm:$0xff]
    %v194 = vld [vmem:[#allocation8 + $0x28] sm:$0xff]
    %v195 = vld [vmem:[#allocation8 + $0x30] sm:$0xff]
    %v196 = vld [vmem:[#allocation8 + $0x38] sm:$0xff]
    %v197 = vld [vmem:[#allocation8 + $0x40] sm:$0xff]
    %v198 = vld [vmem:[#allocation8 + $0x48] sm:$0xff]
    %v199 = vld [vmem:[#allocation8 + $0x50] sm:$0xff]
    %v200 = vld [vmem:[#allocation8 + $0x58] sm:$0xff]
    %v201 = vld [vmem:[#allocation8 + $0x60] sm:$0xff]
    %v202 = vld [vmem:[#allocation8 + $0x68] sm:$0xff]
    %v203 = vld [vmem:[#allocation8 + $0x70] sm:$0xff]
    %v204 = vld [vmem:[#allocation8 + $0x78] sm:$0xff]
    %v205 = vld [vmem:[#allocation8 + $0x80] sm:$0xff]
    %v206 = vld [vmem:[#allocation8 + $0x88] sm:$0xff]
    %v207 = vld [vmem:[#allocation8 + $0x90] sm:$0xff]
    %v208 = vld [vmem:[#allocation8 + $0x98] sm:$0xff]
    %v209 = vld [vmem:[#allocation8 + $0xa0] sm:$0xff]
    %v210 = vld [vmem:[#allocation8 + $0xa8] sm:$0xff]
    %v211 = vld [vmem:[#allocation8 + $0xb0] sm:$0xff]
    %v212 = vld [vmem:[#allocation8 + $0xb8] sm:$0xff]
    %v213 = vld [vmem:[#allocation8 + $0xc0] sm:$0xff]
    %v214 = vld [vmem:[#allocation8 + $0xc8] sm:$0xff]
    %v215 = vld [vmem:[#allocation8 + $0xd0] sm:$0xff]
    %v216 = vld [vmem:[#allocation8 + $0xd8] sm:$0xff]
    %v217 = vld [vmem:[#allocation8 + $0xe0] sm:$0xff]
    %v218 = vld [vmem:[#allocation8 + $0xe8] sm:$0xff]
    %v219 = vld [vmem:[#allocation8 + $0xf0] sm:$0xff]
    %v220 = vld [vmem:[#allocation8 + $0xf8] sm:$0xff]
    %v221 = vld [vmem:[#allocation8 + $0x100] sm:$0xff]
    %v222 = vld [vmem:[#allocation8 + $0x108] sm:$0xff]
    %v223 = vld [vmem:[#allocation8 + $0x110] sm:$0xff]
    %v224 = vld [vmem:[#allocation8 + $0x118] sm:$0xff]
    %v225 = vld [vmem:[#allocation8 + $0x120] sm:$0xff]
    %v226 = vld [vmem:[#allocation8 + $0x128] sm:$0xff]
    %v227 = vld [vmem:[#allocation8 + $0x130] sm:$0xff]
    %v228 = vld [vmem:[#allocation8 + $0x138] sm:$0xff]
    %v229 = vld [vmem:[#allocation8 + $0x140] sm:$0xff]
    %v230 = vld [vmem:[#allocation8 + $0x148] sm:$0xff]
    %v231 = vld [vmem:[#allocation8 + $0x150] sm:$0xff]
    %v232 = vld [vmem:[#allocation8 + $0x158] sm:$0xff]
    %v233 = vld [vmem:[#allocation8 + $0x160] sm:$0xff]
    %v234 = vld [vmem:[#allocation8 + $0x168] sm:$0xff]
    %v235 = vld [vmem:[#allocation8 + $0x170] sm:$0xff]
    %v236 = vld [vmem:[#allocation8 + $0x178] sm:$0xff]
    %v237 = vld [vmem:[#allocation8 + $0x180] sm:$0xff]
    %v238 = vld [vmem:[#allocation8 + $0x188] sm:$0xff]
    %v239 = vld [vmem:[#allocation8 + $0x190] sm:$0xff]
    %v240 = vld [vmem:[#allocation8 + $0x198] sm:$0xff]
    %v241 = vld [vmem:[#allocation8 + $0x1a0] sm:$0xff]
    %v242 = vld [vmem:[#allocation8 + $0x1a8] sm:$0xff]
    %v243 = vld [vmem:[#allocation8 + $0x1b0] sm:$0xff]
    %v244 = vld [vmem:[#allocation8 + $0x1b8] sm:$0xff]
    %v245 = vld [vmem:[#allocation8 + $0x1c0] sm:$0xff]
    %v246 = vld [vmem:[#allocation8 + $0x1c8] sm:$0xff]
    %v247 = vld [vmem:[#allocation8 + $0x1d0] sm:$0xff]
    %v248 = vld [vmem:[#allocation8 + $0x1d8] sm:$0xff]
    %v249 = vld [vmem:[#allocation8 + $0x1e0] sm:$0xff]
    %v250 = vld [vmem:[#allocation8 + $0x1e8] sm:$0xff]
    %v251 = vld [vmem:[#allocation8 + $0x1f0] sm:$0xff]
    %v252 = vld [vmem:[#allocation8 + $0x1f8] sm:$0xff]
    %v253 = vld [vmem:[%s4] sm:$0x3]
    %v255 = vperm.slane %v253, 0
    %v256 = vperm.slane %v253, 1
    %259 = vmatpush.msra.mxu0 %v219
    %260 = vmatpush.msra.mxu0 %v217
    %261 = vmatpush.msra.mxu0 %v215
    %262 = vmatpush.msra.mxu0 %v213
    %263 = vmatpush.msra.mxu0 %v211
    %264 = vmatpush.msra.mxu0 %v209
    %265 = vmatpush.msra.mxu0 %v207
    %266 = vmatpush.msra.mxu0 %v205
    %267 = vmatpush.msra.mxu0 %v203
    %268 = vmatpush.msra.mxu0 %v201
    %269 = vmatpush.msra.mxu0 %v199
    %270 = vmatpush.msra.mxu0 %v197
    %271 = vmatpush.msra.mxu0 %v195
    %272 = vmatpush.msra.mxu0 %v193
    %273 = vmatpush.msra.mxu0 %v191
    %274 = vmatpush.msra.mxu0 %v189
    %275 = vmatmul.f32.gmra.mxu0 %v187
    %v276 = vpop.f32.mrf.mxu0
    %v277 = vadd.f32 %v255, %v276
    %278 = vdwg.mxu0
    %279 = vmatpush.msra.mxu0 %v251
    %280 = vmatpush.msra.mxu0 %v249
    %281 = vmatpush.msra.mxu0 %v247
    %282 = vmatpush.msra.mxu0 %v245
    %283 = vmatpush.msra.mxu0 %v243
    %284 = vmatpush.msra.mxu0 %v241
    %285 = vmatpush.msra.mxu0 %v239
    %286 = vmatpush.msra.mxu0 %v237
    %287 = vmatpush.msra.mxu0 %v235
    %288 = vmatpush.msra.mxu0 %v233
    %289 = vmatpush.msra.mxu0 %v231
    %290 = vmatpush.msra.mxu0 %v229
    %291 = vmatpush.msra.mxu0 %v227
    %292 = vmatpush.msra.mxu0 %v225
    %293 = vmatpush.msra.mxu0 %v223
    %294 = vmatpush.msra.mxu0 %v221
    %295 = vmatmul.f32.gmra.mxu0 %v188
    %v296 = vpop.f32.mrf.mxu0
    %v297 = vadd.f32 %v277, %v296
    %298 = vdwg.mxu0
    %299 = vmatpush.msra.mxu0 %v220
    %300 = vmatpush.msra.mxu0 %v218
    %301 = vmatpush.msra.mxu0 %v216
    %302 = vmatpush.msra.mxu0 %v214
    %303 = vmatpush.msra.mxu0 %v212
    %304 = vmatpush.msra.mxu0 %v210
    %305 = vmatpush.msra.mxu0 %v208
    %306 = vmatpush.msra.mxu0 %v206
    %307 = vmatpush.msra.mxu0 %v204
    %308 = vmatpush.msra.mxu0 %v202
    %309 = vmatpush.msra.mxu0 %v200
    %310 = vmatpush.msra.mxu0 %v198
    %311 = vmatpush.msra.mxu0 %v196
    %312 = vmatpush.msra.mxu0 %v194
    %313 = vmatpush.msra.mxu0 %v192
    %314 = vmatpush.msra.mxu0 %v190
    %315 = vmatmul.f32.gmra.mxu0 %v187
    %v316 = vpop.f32.mrf.mxu0
    %v317 = vadd.f32 %v256, %v316
    %318 = vdwg.mxu0
    %319 = vmatpush.msra.mxu0 %v252
    %320 = vmatpush.msra.mxu0 %v250
    %321 = vmatpush.msra.mxu0 %v248
    %322 = vmatpush.msra.mxu0 %v246
    %323 = vmatpush.msra.mxu0 %v244
    %324 = vmatpush.msra.mxu0 %v242
    %325 = vmatpush.msra.mxu0 %v240
    %326 = vmatpush.msra.mxu0 %v238
    %327 = vmatpush.msra.mxu0 %v236
    %328 = vmatpush.msra.mxu0 %v234
    %329 = vmatpush.msra.mxu0 %v232
    %330 = vmatpush.msra.mxu0 %v230
    %331 = vmatpush.msra.mxu0 %v228
    %332 = vmatpush.msra.mxu0 %v226
    %333 = vmatpush.msra.mxu0 %v224
    %334 = vmatpush.msra.mxu0 %v222
    %335 = vmatmul.f32.gmra.mxu0 %v188
    %v336 = vpop.f32.mrf.mxu0
    %v337 = vadd.f32 %v317, %v336
    %338 = vdwg.mxu0
    %v339 = vtanh.pop %v297
    %v340 = vtanh.pop %v337
    %v341 = vld [vmem:[#allocation10] sm:$0xff]
    %v342 = vld [vmem:[#allocation10 + $0x8] sm:$0xff]
    %v343 = vld [vmem:[#allocation10 + $0x10] sm:$0xff]
    %v344 = vld [vmem:[#allocation10 + $0x18] sm:$0xff]
    %v345 = vld [vmem:[#allocation10 + $0x20] sm:$0xff]
    %v346 = vld [vmem:[#allocation10 + $0x28] sm:$0xff]
    %v347 = vld [vmem:[#allocation10 + $0x30] sm:$0xff]
    %v348 = vld [vmem:[#allocation10 + $0x38] sm:$0xff]
    %v349 = vld [vmem:[#allocation10 + $0x40] sm:$0xff]
    %v350 = vld [vmem:[#allocation10 + $0x48] sm:$0xff]
    %v351 = vld [vmem:[#allocation10 + $0x50] sm:$0xff]
    %v352 = vld [vmem:[#allocation10 + $0x58] sm:$0xff]
    %v353 = vld [vmem:[#allocation10 + $0x60] sm:$0xff]
    %v354 = vld [vmem:[#allocation10 + $0x68] sm:$0xff]
    %v355 = vld [vmem:[#allocation10 + $0x70] sm:$0xff]
    %v356 = vld [vmem:[#allocation10 + $0x78] sm:$0xff]
    %v357 = vld [vmem:[#allocation10 + $0x80] sm:$0xff]
    %v358 = vld [vmem:[#allocation10 + $0x88] sm:$0xff]
    %v359 = vld [vmem:[#allocation10 + $0x90] sm:$0xff]
    %v360 = vld [vmem:[#allocation10 + $0x98] sm:$0xff]
    %v361 = vld [vmem:[#allocation10 + $0xa0] sm:$0xff]
    %v362 = vld [vmem:[#allocation10 + $0xa8] sm:$0xff]
    %v363 = vld [vmem:[#allocation10 + $0xb0] sm:$0xff]
    %v364 = vld [vmem:[#allocation10 + $0xb8] sm:$0xff]
    %v365 = vld [vmem:[#allocation10 + $0xc0] sm:$0xff]
    %v366 = vld [vmem:[#allocation10 + $0xc8] sm:$0xff]
    %v367 = vld [vmem:[#allocation10 + $0xd0] sm:$0xff]
    %v368 = vld [vmem:[#allocation10 + $0xd8] sm:$0xff]
    %v369 = vld [vmem:[#allocation10 + $0xe0] sm:$0xff]
    %v370 = vld [vmem:[#allocation10 + $0xe8] sm:$0xff]
    %v371 = vld [vmem:[#allocation10 + $0xf0] sm:$0xff]
    %v372 = vld [vmem:[#allocation10 + $0xf8] sm:$0xff]
    %v373 = vld [vmem:[#allocation10 + $0x100] sm:$0xff]
    %v374 = vld [vmem:[#allocation10 + $0x108] sm:$0xff]
    %v375 = vld [vmem:[#allocation10 + $0x110] sm:$0xff]
    %v376 = vld [vmem:[#allocation10 + $0x118] sm:$0xff]
    %v377 = vld [vmem:[#allocation10 + $0x120] sm:$0xff]
    %v378 = vld [vmem:[#allocation10 + $0x128] sm:$0xff]
    %v379 = vld [vmem:[#allocation10 + $0x130] sm:$0xff]
    %v380 = vld [vmem:[#allocation10 + $0x138] sm:$0xff]
    %v381 = vld [vmem:[#allocation10 + $0x140] sm:$0xff]
    %v382 = vld [vmem:[#allocation10 + $0x148] sm:$0xff]
    %v383 = vld [vmem:[#allocation10 + $0x150] sm:$0xff]
    %v384 = vld [vmem:[#allocation10 + $0x158] sm:$0xff]
    %v385 = vld [vmem:[#allocation10 + $0x160] sm:$0xff]
    %v386 = vld [vmem:[#allocation10 + $0x168] sm:$0xff]
    %v387 = vld [vmem:[#allocation10 + $0x170] sm:$0xff]
    %v388 = vld [vmem:[#allocation10 + $0x178] sm:$0xff]
    %v389 = vld [vmem:[#allocation10 + $0x180] sm:$0xff]
    %v390 = vld [vmem:[#allocation10 + $0x188] sm:$0xff]
    %v391 = vld [vmem:[#allocation10 + $0x190] sm:$0xff]
    %v392 = vld [vmem:[#allocation10 + $0x198] sm:$0xff]
    %v393 = vld [vmem:[#allocation10 + $0x1a0] sm:$0xff]
    %v394 = vld [vmem:[#allocation10 + $0x1a8] sm:$0xff]
    %v395 = vld [vmem:[#allocation10 + $0x1b0] sm:$0xff]
    %v396 = vld [vmem:[#allocation10 + $0x1b8] sm:$0xff]
    %v397 = vld [vmem:[#allocation10 + $0x1c0] sm:$0xff]
    %v398 = vld [vmem:[#allocation10 + $0x1c8] sm:$0xff]
    %v399 = vld [vmem:[#allocation10 + $0x1d0] sm:$0xff]
    %v400 = vld [vmem:[#allocation10 + $0x1d8] sm:$0xff]
    %v401 = vld [vmem:[#allocation10 + $0x1e0] sm:$0xff]
    %v402 = vld [vmem:[#allocation10 + $0x1e8] sm:$0xff]
    %v403 = vld [vmem:[#allocation10 + $0x1f0] sm:$0xff]
    %v404 = vld [vmem:[#allocation10 + $0x1f8] sm:$0xff]
    %v405 = vld [vmem:[%s6] sm:$0x3]
    %v407 = vperm.slane %v405, 0
    %v408 = vperm.slane %v405, 1
    %411 = vmatpush.msra.mxu0 %v371
    %412 = vmatpush.msra.mxu0 %v369
    %413 = vmatpush.msra.mxu0 %v367
    %414 = vmatpush.msra.mxu0 %v365
    %415 = vmatpush.msra.mxu0 %v363
    %416 = vmatpush.msra.mxu0 %v361
    %417 = vmatpush.msra.mxu0 %v359
    %418 = vmatpush.msra.mxu0 %v357
    %419 = vmatpush.msra.mxu0 %v355
    %420 = vmatpush.msra.mxu0 %v353
    %421 = vmatpush.msra.mxu0 %v351
    %422 = vmatpush.msra.mxu0 %v349
    %423 = vmatpush.msra.mxu0 %v347
    %424 = vmatpush.msra.mxu0 %v345
    %425 = vmatpush.msra.mxu0 %v343
    %426 = vmatpush.msra.mxu0 %v341
    %427 = vmatmul.f32.gmra.mxu0 %v339
    %v428 = vpop.f32.mrf.mxu0
    %v429 = vadd.f32 %v407, %v428
    %430 = vdwg.mxu0
    %431 = vmatpush.msra.mxu0 %v403
    %432 = vmatpush.msra.mxu0 %v401
    %433 = vmatpush.msra.mxu0 %v399
    %434 = vmatpush.msra.mxu0 %v397
    %435 = vmatpush.msra.mxu0 %v395
    %436 = vmatpush.msra.mxu0 %v393
    %437 = vmatpush.msra.mxu0 %v391
    %438 = vmatpush.msra.mxu0 %v389
    %439 = vmatpush.msra.mxu0 %v387
    %440 = vmatpush.msra.mxu0 %v385
    %441 = vmatpush.msra.mxu0 %v383
    %442 = vmatpush.msra.mxu0 %v381
    %443 = vmatpush.msra.mxu0 %v379
    %444 = vmatpush.msra.mxu0 %v377
    %445 = vmatpush.msra.mxu0 %v375
    %446 = vmatpush.msra.mxu0 %v373
    %447 = vmatmul.f32.gmra.mxu0 %v340
    %v448 = vpop.f32.mrf.mxu0
    %v449 = vadd.f32 %v429, %v448
    %450 = vdwg.mxu0
    %451 = vmatpush.msra.mxu0 %v372
    %452 = vmatpush.msra.mxu0 %v370
    %453 = vmatpush.msra.mxu0 %v368
    %454 = vmatpush.msra.mxu0 %v366
    %455 = vmatpush.msra.mxu0 %v364
    %456 = vmatpush.msra.mxu0 %v362
    %457 = vmatpush.msra.mxu0 %v360
    %458 = vmatpush.msra.mxu0 %v358
    %459 = vmatpush.msra.mxu0 %v356
    %460 = vmatpush.msra.mxu0 %v354
    %461 = vmatpush.msra.mxu0 %v352
    %462 = vmatpush.msra.mxu0 %v350
    %463 = vmatpush.msra.mxu0 %v348
    %464 = vmatpush.msra.mxu0 %v346
    %465 = vmatpush.msra.mxu0 %v344
    %466 = vmatpush.msra.mxu0 %v342
    %467 = vmatmul.f32.gmra.mxu0 %v339
    %v468 = vpop.f32.mrf.mxu0
    %v469 = vadd.f32 %v408, %v468
    %470 = vdwg.mxu0
    %471 = vmatpush.msra.mxu0 %v404
    %472 = vmatpush.msra.mxu0 %v402
    %473 = vmatpush.msra.mxu0 %v400
    %474 = vmatpush.msra.mxu0 %v398
    %475 = vmatpush.msra.mxu0 %v396
    %476 = vmatpush.msra.mxu0 %v394
    %477 = vmatpush.msra.mxu0 %v392
    %478 = vmatpush.msra.mxu0 %v390
    %479 = vmatpush.msra.mxu0 %v388
    %480 = vmatpush.msra.mxu0 %v386
    %481 = vmatpush.msra.mxu0 %v384
    %482 = vmatpush.msra.mxu0 %v382
    %483 = vmatpush.msra.mxu0 %v380
    %484 = vmatpush.msra.mxu0 %v378
    %485 = vmatpush.msra.mxu0 %v376
    %486 = vmatpush.msra.mxu0 %v374
    %487 = vmatmul.f32.gmra.mxu0 %v340
    %v488 = vpop.f32.mrf.mxu0
    %v489 = vadd.f32 %v469, %v488
    %490 = vdwg.mxu0
    %v491 = vtanh.pop %v449
    %v492 = vtanh.pop %v489
    %v493 = vld [vmem:[#allocation11] sm:$0xff]
    %v494 = vld [vmem:[#allocation11 + $0x8] sm:$0xff]
    %v495 = vld [vmem:[#allocation11 + $0x10] sm:$0xff]
    %v496 = vld [vmem:[#allocation11 + $0x18] sm:$0xff]
    %v497 = vld [vmem:[#allocation11 + $0x20] sm:$0xff]
    %v498 = vld [vmem:[#allocation11 + $0x28] sm:$0xff]
    %v499 = vld [vmem:[#allocation11 + $0x30] sm:$0xff]
    %v500 = vld [vmem:[#allocation11 + $0x38] sm:$0xff]
    %v501 = vld [vmem:[#allocation11 + $0x40] sm:$0xff]
    %v502 = vld [vmem:[#allocation11 + $0x48] sm:$0xff]
    %v503 = vld [vmem:[#allocation11 + $0x50] sm:$0xff]
    %v504 = vld [vmem:[#allocation11 + $0x58] sm:$0xff]
    %v505 = vld [vmem:[#allocation11 + $0x60] sm:$0xff]
    %v506 = vld [vmem:[#allocation11 + $0x68] sm:$0xff]
    %v507 = vld [vmem:[#allocation11 + $0x70] sm:$0xff]
    %v508 = vld [vmem:[#allocation11 + $0x78] sm:$0xff]
    %v509 = vld [vmem:[#allocation11 + $0x80] sm:$0xff]
    %v510 = vld [vmem:[#allocation11 + $0x88] sm:$0xff]
    %v511 = vld [vmem:[#allocation11 + $0x90] sm:$0xff]
    %v512 = vld [vmem:[#allocation11 + $0x98] sm:$0xff]
    %v513 = vld [vmem:[#allocation11 + $0xa0] sm:$0xff]
    %v514 = vld [vmem:[#allocation11 + $0xa8] sm:$0xff]
    %v515 = vld [vmem:[#allocation11 + $0xb0] sm:$0xff]
    %v516 = vld [vmem:[#allocation11 + $0xb8] sm:$0xff]
    %v517 = vld [vmem:[#allocation11 + $0xc0] sm:$0xff]
    %v518 = vld [vmem:[#allocation11 + $0xc8] sm:$0xff]
    %v519 = vld [vmem:[#allocation11 + $0xd0] sm:$0xff]
    %v520 = vld [vmem:[#allocation11 + $0xd8] sm:$0xff]
    %v521 = vld [vmem:[#allocation11 + $0xe0] sm:$0xff]
    %v522 = vld [vmem:[#allocation11 + $0xe8] sm:$0xff]
    %v523 = vld [vmem:[#allocation11 + $0xf0] sm:$0xff]
    %v524 = vld [vmem:[#allocation11 + $0xf8] sm:$0xff]
    %v525 = vld [vmem:[%s8] sm:$0x1]
    %v527 = vperm.slane %v525, 0
    %529 = vmatpush.msra.mxu0 %v508
    %530 = vmatpush.msra.mxu0 %v507
    %531 = vmatpush.msra.mxu0 %v506
    %532 = vmatpush.msra.mxu0 %v505
    %533 = vmatpush.msra.mxu0 %v504
    %534 = vmatpush.msra.mxu0 %v503
    %535 = vmatpush.msra.mxu0 %v502
    %536 = vmatpush.msra.mxu0 %v501
    %537 = vmatpush.msra.mxu0 %v500
    %538 = vmatpush.msra.mxu0 %v499
    %539 = vmatpush.msra.mxu0 %v498
    %540 = vmatpush.msra.mxu0 %v497
    %541 = vmatpush.msra.mxu0 %v496
    %542 = vmatpush.msra.mxu0 %v495
    %543 = vmatpush.msra.mxu0 %v494
    %544 = vmatpush.msra.mxu0 %v493
    %545 = vmatmul.f32.gmra.mxu0 %v491
    %v546 = vpop.f32.mrf.mxu0
    %v547 = vadd.f32 %v527, %v546
    %548 = vdwg.mxu0
    %549 = vmatpush.msra.mxu0 %v524
    %550 = vmatpush.msra.mxu0 %v523
    %551 = vmatpush.msra.mxu0 %v522
    %552 = vmatpush.msra.mxu0 %v521
    %553 = vmatpush.msra.mxu0 %v520
    %554 = vmatpush.msra.mxu0 %v519
    %555 = vmatpush.msra.mxu0 %v518
    %556 = vmatpush.msra.mxu0 %v517
    %557 = vmatpush.msra.mxu0 %v516
    %558 = vmatpush.msra.mxu0 %v515
    %559 = vmatpush.msra.mxu0 %v514
    %560 = vmatpush.msra.mxu0 %v513
    %561 = vmatpush.msra.mxu0 %v512
    %562 = vmatpush.msra.mxu0 %v511
    %563 = vmatpush.msra.mxu0 %v510
    %564 = vmatpush.msra.mxu0 %v509
    %565 = vmatmul.f32.gmra.mxu0 %v492
    %v566 = vpop.f32.mrf.mxu0
    %v567 = vadd.f32 %v547, %v566
    %568 = vdwg.mxu0
    %v569 = vtanh.pop %v567
    %570 = vst [vmem:[#allocation13] sm:$0xff] %v569
    // Predicated region
    $region62: #{tpu_custom_call.1} parent=1 // pred_check
      _
    $region63: #{tpu_custom_call.1} parent=1 // pred_check_branch
      %572 = sbr.rel (0) target = $region65
    $region64: #{tpu_custom_call.1} parent=1 // pred_region
      %574 = vsyncadd [#allocation4], 0
      %s576 = sshll.u32 [#allocation13], 4
      %s577 = int_to_ptr.vmem [resolvable:$true] %s576
      %s578 = sshll.u32 %s9, 4
      %s579 = int_to_ptr.hbm [resolvable:$true] %s578
      %581 = dma.vmem_to_hbm [thread:$0]  %s577, 128, %s579, [#allocation4]
    $region65: #{tpu_custom_call.1} parent=1 // pred_fallthru
      _
    // Predicated region
    $region66: #{tpu_custom_call.1} parent=1 // pred_check
      _
    $region67: #{tpu_custom_call.1} parent=1 // pred_check_branch
      %583 = sbr.rel (0) target = $region69
    $region68: #{tpu_custom_call.1} parent=1 // pred_region
      %585 = dma.done [#allocation4], 128
    $region69: #{tpu_custom_call.1} parent=1 // pred_fallthru
      _
    %586 = vsyncpa [#allocation3], 1
    %587 = vsyncpa [#allocation6], 1
    %588 = vsyncpa [#allocation9], 1
    %589 = vsyncpa [#allocation12], 1
    %590 = vsyncpa [#allocation4], 1

</llo_original>
